<compile_context>
chip_gen: v5e
topology: v5e:2x2
jax: 0.10.0
libtpu: 0.0.40
codegen_flags: <defaults>
</compile_context>

<pallas_src>
import jax
import jax.numpy as jnp
from jax.experimental import pallas as pl
from jax.experimental.pallas import tpu as pltpu

HIDDEN = 50           # logical hidden width (matches the PyTorch module)
HIDDEN_PAD = 128      # lane-dense padded hidden width
TB_MAX = 1024         # max batch-tile rows
VMEM_BUDGET = 24 * 1024 * 1024   # bytes of VMEM we allow the streamed tiles to use


def _round_up(x, m):
    return (x + m - 1) // m * m


def _mlp_kernel(x_ref, w1_ref, b1_ref, w2_ref, b2_ref, w3_ref, b3_ref, o_ref):
    # x arrives f32 from HBM; cast to bf16 here (free VPU work in a DMA-bound kernel).
    x = x_ref[...].astype(jnp.bfloat16)
    # Layer 1: (TB, D)bf16 @ (D, 128)bf16 -> f32 acc; bias + ReLU in f32.
    h1 = jnp.dot(x, w1_ref[...], preferred_element_type=jnp.float32)
    h1 = jnp.maximum(h1 + b1_ref[...], 0.0)
    # Layer 2: (TB, 128) @ (128, 128) -> f32 acc; bias + ReLU in f32.
    h2 = jnp.dot(h1.astype(jnp.bfloat16), w2_ref[...],
                 preferred_element_type=jnp.float32)
    h2 = jnp.maximum(h2 + b2_ref[...], 0.0)
    # Layer 3, transposed: (1, 128) contracted with (TB, 128) on the hidden dim
    # -> (1, TB) lane-dense row (batch along lanes).  Only 4 B/row hits HBM.
    yT = jax.lax.dot_general(
        w3_ref[...], h2.astype(jnp.bfloat16),
        dimension_numbers=(((1,), (1,)), ((), ())),
        preferred_element_type=jnp.float32)
    o_ref[...] = (yT + b3_ref[...]).astype(o_ref.dtype).reshape(o_ref.shape)


def prepare_params(params):
    """One-time prep: PyTorch (out,in) -> padded (in,out) bf16 matmul operands, f32 biases."""
    D = params["w1"].shape[1]
    w1 = jnp.zeros((D, HIDDEN_PAD), jnp.bfloat16)
    w1 = w1.at[:, :HIDDEN].set(params["w1"].T.astype(jnp.bfloat16))
    b1 = jnp.zeros((1, HIDDEN_PAD), jnp.float32).at[0, :HIDDEN].set(params["b1"])
    w2 = jnp.zeros((HIDDEN_PAD, HIDDEN_PAD), jnp.bfloat16)
    w2 = w2.at[:HIDDEN, :HIDDEN].set(params["w2"].T.astype(jnp.bfloat16))
    b2 = jnp.zeros((1, HIDDEN_PAD), jnp.float32).at[0, :HIDDEN].set(params["b2"])
    # Final layer kept in ROW form (1, HIDDEN_PAD) for the transposed layer-3 dot.
    w3 = jnp.zeros((1, HIDDEN_PAD), jnp.bfloat16)
    w3 = w3.at[0, :HIDDEN].set(params["w3"][0].astype(jnp.bfloat16))
    b3 = params["b3"].reshape(1, 1).astype(jnp.float32)
    return (w1, b1, w2, b2, w3, b3)


def mlp_forward(x, prepped):
    """x: (B, input_size) f32.  prepped: output of prepare_params().  Returns (B, 1) f32."""
    w1, b1, w2, b2, w3, b3 = prepped
    B, D = x.shape

    # --- batch-tile selection -------------------------------------------------
    # Big enough to amortize per-step overhead; small enough that the grid has
    # >=2 steps (v7x megacore) and the double-buffered tiles fit the VMEM budget.
    TB = min(TB_MAX, _round_up(pl.cdiv(B, 2), 8))
    weight_bytes = ((D + HIDDEN_PAD + 1) * HIDDEN_PAD) * 2 + (2 * HIDDEN_PAD + 1) * 4
    per_row_bytes = 2 * (D * 4 + 4)            # double-buffered f32 x row + f32 out elem
    tb_budget = max(8, (VMEM_BUDGET - 2 * weight_bytes) // per_row_bytes)
    TB = max(8, min(TB, tb_budget // 8 * 8))
    nb = pl.cdiv(B, TB)
    B_pad = nb * TB

    if B_pad != B:                             # pad only when needed; stays f32 (cast is in-kernel)
        x = jnp.pad(x, ((0, B_pad - B), (0, 0)))

    flops = 2 * B_pad * HIDDEN * (D + HIDDEN + 1)
    bytes_accessed = B_pad * D * 4 + B_pad * 4 + weight_bytes

    grid_spec = pltpu.PrefetchScalarGridSpec(
        num_scalar_prefetch=0,
        grid=(nb,),
        in_specs=[
            pl.BlockSpec((TB, D), lambda i: (i, 0)),                    # x: streamed f32
            pl.BlockSpec((D, HIDDEN_PAD), lambda i: (0, 0)),            # w1: VMEM-resident
            pl.BlockSpec((1, HIDDEN_PAD), lambda i: (0, 0)),            # b1
            pl.BlockSpec((HIDDEN_PAD, HIDDEN_PAD), lambda i: (0, 0)),   # w2
            pl.BlockSpec((1, HIDDEN_PAD), lambda i: (0, 0)),            # b2
            pl.BlockSpec((1, HIDDEN_PAD), lambda i: (0, 0)),            # w3 (row form)
            pl.BlockSpec((1, 1), lambda i: (0, 0)),                     # b3
        ],
        out_specs=pl.BlockSpec((1, 1, TB), lambda i: (i, 0, 0)),        # compact lane-dense rows
    )

    outT = pl.pallas_call(
        _mlp_kernel,
        out_shape=jax.ShapeDtypeStruct((nb, 1, TB), jnp.float32),
        grid_spec=grid_spec,
        compiler_params=pltpu.CompilerParams(
            dimension_semantics=("parallel",),      # shard batch grid across TCs on v7x
            vmem_limit_bytes=32 * 1024 * 1024,      # tiles budgeted to 24 MiB, headroom left
        ),
        cost_estimate=pl.CostEstimate(
            flops=flops, transcendentals=0, bytes_accessed=bytes_accessed),
    )(x, w1, b1, w2, b2, w3, b3)

    # (nb, 1, TB) row-major == batch order; cheap reshape + slice, no padded-slab re-read.
    return outT.reshape(B_pad)[:B].reshape(B, 1)


def init_params(input_size, key):
    """Deterministic init matching the PyTorch parameter shapes (out_features, in_features)."""
    k1, k2, k3, k4, k5, k6 = jax.random.split(key, 6)
    scale1 = 1.0 / jnp.sqrt(input_size)
    scale2 = 1.0 / jnp.sqrt(HIDDEN)
    return {
        "w1": jax.random.uniform(k1, (HIDDEN, input_size), jnp.float32, -scale1, scale1),
        "b1": jax.random.uniform(k2, (HIDDEN,), jnp.float32, -scale1, scale1),
        "w2": jax.random.uniform(k3, (HIDDEN, HIDDEN), jnp.float32, -scale2, scale2),
        "b2": jax.random.uniform(k4, (HIDDEN,), jnp.float32, -scale2, scale2),
        "w3": jax.random.uniform(k5, (1, HIDDEN), jnp.float32, -scale2, scale2),
        "b3": jax.random.uniform(k6, (1,), jnp.float32, -scale2, scale2),
    }


def mlp_reference_f32(x, p):
    """Pure-JAX f32 reference of the PyTorch forward."""
    h = jnp.maximum(x @ p["w1"].T + p["b1"], 0.0)
    h = jnp.maximum(h @ p["w2"].T + p["b2"], 0.0)
    return h @ p["w3"].T + p["b3"]


def mlp_reference_bf16(x, p):
    """Pure-JAX reference with the same bf16 operands / f32 accumulation as the kernel."""
    bf = jnp.bfloat16
    h = jnp.dot(x.astype(bf), p["w1"].T.astype(bf), preferred_element_type=jnp.float32)
    h = jnp.maximum(h + p["b1"], 0.0)
    h = jnp.dot(h.astype(bf), p["w2"].T.astype(bf), preferred_element_type=jnp.float32)
    h = jnp.maximum(h + p["b2"], 0.0)
    y = jnp.dot(h.astype(bf), p["w3"].T.astype(bf), preferred_element_type=jnp.float32)
    return y + p["b3"]


if __name__ == "__main__":
    key = jax.random.PRNGKey(0)
    k_params, k_x = jax.random.split(key)

    batch, input_size = 8, 32
    params = init_params(input_size, k_params)
    prepped = prepare_params(params)
    x = jax.random.normal(k_x, (batch, input_size), jnp.float32)

    out = mlp_forward(x, prepped)
    jax.block_until_ready(out)
    assert out.shape == (batch, 1), out.shape

    # Tight check vs a reference using identical bf16 operands / f32 accumulation.
    ref_bf16 = mlp_reference_bf16(x, params)
    assert jnp.allclose(out, ref_bf16, atol=1e-3, rtol=1e-3), "mismatch vs bf16 reference"
    # Loose check vs the pure-f32 PyTorch-equivalent forward (bf16 quantization error only).
    ref_f32 = mlp_reference_f32(x, params)
    assert jnp.allclose(out, ref_f32, atol=5e-2, rtol=5e-2), "mismatch vs f32 reference"

    print("KERNEL_OK")
</pallas_src>

<mosaic_0001>
module attributes {stable_mosaic.version = 11 : i64} {
  func.func @_mlp_kernel(%arg0: i32, %arg1: memref<8x32xf32, #tpu.memory_space<vmem>>, %arg2: memref<32x128xbf16, #tpu.memory_space<vmem>>, %arg3: memref<1x128xf32, #tpu.memory_space<vmem>>, %arg4: memref<128x128xbf16, #tpu.memory_space<vmem>>, %arg5: memref<1x128xf32, #tpu.memory_space<vmem>>, %arg6: memref<1x128xbf16, #tpu.memory_space<vmem>>, %arg7: memref<1x1xf32, #tpu.memory_space<vmem>>, %arg8: memref<1x1x8xf32, #tpu.memory_space<vmem>>) attributes {dimension_semantics = [#tpu.dimension_semantics<parallel>], iteration_bounds = array<i64: 1>, scalar_prefetch = 0 : i64, scratch_operands = 0 : i64, tpu.core_type = #tpu.core_type<tc>, window_params = [{transform_indices = @transform_0, window_bounds = array<i64: 8, 32>}, {pipeline_mode = #tpu.pipeline_mode<synchronous>, transform_indices = @transform_1, window_bounds = array<i64: 32, 128>}, {pipeline_mode = #tpu.pipeline_mode<synchronous>, transform_indices = @transform_2, window_bounds = array<i64: 1, 128>}, {pipeline_mode = #tpu.pipeline_mode<synchronous>, transform_indices = @transform_3, window_bounds = array<i64: 128, 128>}, {pipeline_mode = #tpu.pipeline_mode<synchronous>, transform_indices = @transform_4, window_bounds = array<i64: 1, 128>}, {pipeline_mode = #tpu.pipeline_mode<synchronous>, transform_indices = @transform_5, window_bounds = array<i64: 1, 128>}, {pipeline_mode = #tpu.pipeline_mode<synchronous>, transform_indices = @transform_6, window_bounds = array<i64: 1, 1>}, {transform_indices = @transform_7, window_bounds = array<i64: 1, 1, 8>}]} {
    %c0 = arith.constant 0 : index
    %c0_0 = arith.constant 0 : index
    %0 = vector.load %arg1[%c0, %c0_0] : memref<8x32xf32, #tpu.memory_space<vmem>>, vector<8x32xf32>
    %1 = arith.truncf %0 : vector<8x32xf32> to vector<8x32xbf16>
    %c0_1 = arith.constant 0 : index
    %c0_2 = arith.constant 0 : index
    %2 = vector.load %arg2[%c0_1, %c0_2] : memref<32x128xbf16, #tpu.memory_space<vmem>>, vector<32x128xbf16>
    %cst = arith.constant dense<0.000000e+00> : vector<8x128xf32>
    %3 = tpu.matmul %1, %2, %cst {dimension_numbers = #tpu.dot_dimension_numbers<[1], [0], [0], [1], [0, 0, 1, 1], [], []>} : vector<8x32xbf16>, vector<32x128xbf16>, vector<8x128xf32> -> vector<8x128xf32>
    %c0_3 = arith.constant 0 : index
    %c0_4 = arith.constant 0 : index
    %4 = vector.load %arg3[%c0_3, %c0_4] : memref<1x128xf32, #tpu.memory_space<vmem>>, vector<1x128xf32>
    %5 = vector.broadcast %4 : vector<1x128xf32> to vector<8x128xf32>
    %6 = arith.addf %3, %5 : vector<8x128xf32>
    %cst_5 = arith.constant 0.000000e+00 : f32
    %7 = vector.broadcast %cst_5 : f32 to vector<8x128xf32>
    %8 = arith.maximumf %6, %7 : vector<8x128xf32>
    %9 = arith.truncf %8 : vector<8x128xf32> to vector<8x128xbf16>
    %c0_6 = arith.constant 0 : index
    %c0_7 = arith.constant 0 : index
    %10 = vector.load %arg4[%c0_6, %c0_7] : memref<128x128xbf16, #tpu.memory_space<vmem>>, vector<128x128xbf16>
    %cst_8 = arith.constant dense<0.000000e+00> : vector<8x128xf32>
    %11 = tpu.matmul %9, %10, %cst_8 {dimension_numbers = #tpu.dot_dimension_numbers<[1], [0], [0], [1], [0, 0, 1, 1], [], []>} : vector<8x128xbf16>, vector<128x128xbf16>, vector<8x128xf32> -> vector<8x128xf32>
    %c0_9 = arith.constant 0 : index
    %c0_10 = arith.constant 0 : index
    %12 = vector.load %arg5[%c0_9, %c0_10] : memref<1x128xf32, #tpu.memory_space<vmem>>, vector<1x128xf32>
    %13 = vector.broadcast %12 : vector<1x128xf32> to vector<8x128xf32>
    %14 = arith.addf %11, %13 : vector<8x128xf32>
    %cst_11 = arith.constant 0.000000e+00 : f32
    %15 = vector.broadcast %cst_11 : f32 to vector<8x128xf32>
    %16 = arith.maximumf %14, %15 : vector<8x128xf32>
    %c0_12 = arith.constant 0 : index
    %c0_13 = arith.constant 0 : index
    %17 = vector.load %arg6[%c0_12, %c0_13] : memref<1x128xbf16, #tpu.memory_space<vmem>>, vector<1x128xbf16>
    %18 = arith.truncf %16 : vector<8x128xf32> to vector<8x128xbf16>
    %cst_14 = arith.constant dense<0.000000e+00> : vector<1x8xf32>
    %19 = tpu.matmul %17, %18, %cst_14 {dimension_numbers = #tpu.dot_dimension_numbers<[1], [1], [0], [0], [0, 0, 1, 0], [], []>} : vector<1x128xbf16>, vector<8x128xbf16>, vector<1x8xf32> -> vector<1x8xf32>
    %c0_15 = arith.constant 0 : index
    %c0_16 = arith.constant 0 : index
    %20 = vector.load %arg7[%c0_15, %c0_16] : memref<1x1xf32, #tpu.memory_space<vmem>>, vector<1x1xf32>
    %21 = vector.broadcast %20 : vector<1x1xf32> to vector<1x8xf32>
    %22 = arith.addf %19, %21 : vector<1x8xf32>
    %23 = vector.shape_cast %22 : vector<1x8xf32> to vector<1x1x8xf32>
    %c0_17 = arith.constant 0 : index
    %c0_18 = arith.constant 0 : index
    %c0_19 = arith.constant 0 : index
    %24 = vector.load %arg8[%c0_17, %c0_18, %c0_19] : memref<1x1x8xf32, #tpu.memory_space<vmem>>, vector<1x1x8xf32>
    tpu.vector_store %arg8[%c0_17, %c0_18, %c0_19], %23 {strides = array<i32>} : memref<1x1x8xf32, #tpu.memory_space<vmem>>, vector<1x1x8xf32>,
    return
  }
  func.func @transform_0(%arg0: i32) -> (i32, i32) {
    %c0_i32 = arith.constant 0 : i32
    %c0_i32_0 = arith.constant 0 : i32
    return %arg0, %c0_i32 : i32, i32
  }
  func.func @transform_1(%arg0: i32) -> (i32, i32) {
    %c0_i32 = arith.constant 0 : i32
    %c0_i32_0 = arith.constant 0 : i32
    %c0_i32_1 = arith.constant 0 : i32
    return %c0_i32, %c0_i32_0 : i32, i32
  }
  func.func @transform_2(%arg0: i32) -> (i32, i32) {
    %c0_i32 = arith.constant 0 : i32
    %c0_i32_0 = arith.constant 0 : i32
    %c0_i32_1 = arith.constant 0 : i32
    return %c0_i32, %c0_i32_0 : i32, i32
  }
  func.func @transform_3(%arg0: i32) -> (i32, i32) {
    %c0_i32 = arith.constant 0 : i32
    %c0_i32_0 = arith.constant 0 : i32
    %c0_i32_1 = arith.constant 0 : i32
    return %c0_i32, %c0_i32_0 : i32, i32
  }
  func.func @transform_4(%arg0: i32) -> (i32, i32) {
    %c0_i32 = arith.constant 0 : i32
    %c0_i32_0 = arith.constant 0 : i32
    %c0_i32_1 = arith.constant 0 : i32
    return %c0_i32, %c0_i32_0 : i32, i32
  }
  func.func @transform_5(%arg0: i32) -> (i32, i32) {
    %c0_i32 = arith.constant 0 : i32
    %c0_i32_0 = arith.constant 0 : i32
    %c0_i32_1 = arith.constant 0 : i32
    return %c0_i32, %c0_i32_0 : i32, i32
  }
  func.func @transform_6(%arg0: i32) -> (i32, i32) {
    %c0_i32 = arith.constant 0 : i32
    %c0_i32_0 = arith.constant 0 : i32
    %c0_i32_1 = arith.constant 0 : i32
    return %c0_i32, %c0_i32_0 : i32, i32
  }
  func.func @transform_7(%arg0: i32) -> (i32, i32, i32) {
    %c0_i32 = arith.constant 0 : i32
    %c0_i32_0 = arith.constant 0 : i32
    %c0_i32_1 = arith.constant 0 : i32
    return %arg0, %c0_i32, %c0_i32_0 : i32, i32, i32
  }
}

</mosaic_0001>

<llo_original>
// kernel: tpu_custom_call.1
$region0: #{tpu_custom_call.1}
  #allocation0 [shape = 'u32[]', space=smem, size = 0x4, offset = 0x4, fixed_abs, tag = 'smem constant byte address 0x4 - core index']
  #allocation1 [shape = 'u32[72,128]{1,0:T(1,128)}', space=vmem, size = 0x9000, scoped, tag = 'internal scratch']
  #allocation2 [shape = 'f32[1,1]{1,0:T(1,128)S(1)}', space=vmem, size = 0x200, scoped, tag = 'scoped memory for tpu_custom_call.1']
  %s0 = inlined_call_operand.hbm [shape: f32[8,32], index: 0, kind: input, shape index: {}]
  %s1 = inlined_call_operand.hbm [shape: bf16[32,128], index: 1, kind: input, shape index: {}]
  %s2 = inlined_call_operand.vmem [shape: f32[1,128], index: 2, kind: input, shape index: {}]
  %s3 = inlined_call_operand.hbm [shape: bf16[128,128], index: 3, kind: input, shape index: {}]
  %s4 = inlined_call_operand.vmem [shape: f32[1,128], index: 4, kind: input, shape index: {}]
  %s5 = inlined_call_operand.vmem [shape: bf16[1,128], index: 5, kind: input, shape index: {}]
  %s6 = inlined_call_operand.<no memory space> [shape: f32[1,1], index: 6, kind: input, shape index: {}]
  %s7 = inlined_call_operand.hbm [shape: f32[1,1,8], index: 7, kind: output, shape index: {}]
  %s8 = sld [smem:[#allocation0]]
  $region50: #{tpu_custom_call.1} parent=0
    _
  %s10 = ssub.s32 1, %s8
  %s11 = scalar_select 0, %s10, %s8
  %v12 = vstv %s6
  %13 = vst [vmem:[#allocation2] sm:$0x1] %v12
  $region1: #{tpu_custom_call.1} parent=0
    #allocation3 [shape = 'u8[4096]{0}', space=vmem, size = 0x1000, scoped, tag = 'input window, operand 0, single buffered']
    #allocation4 [shape = 's32[1]{0}', space=sflag, size = 0x4, scoped, tag = 'scoped memory for tpu_custom_call.1']
    #allocation5 [shape = 's32[1]{0}', space=sflag, size = 0x4, scoped, tag = 'scoped memory for tpu_custom_call.1']
    #allocation6 [shape = 'u8[8192]{0}', space=vmem, size = 0x2000, scoped, tag = 'input window, operand 1, single buffered']
    #allocation7 [shape = 's32[1]{0}', space=sflag, size = 0x4, scoped, tag = 'scoped memory for tpu_custom_call.1']
    #allocation8 [shape = 'u8[32768]{0}', space=vmem, size = 0x8000, scoped, tag = 'input window, operand 3, single buffered']
    #allocation9 [shape = 'u8[512]{0}', space=vmem, size = 0x400, scoped, tag = 'output window, operand 0, single buffered']
    %14 = vsyncpa [#allocation4], 0
    %15 = vsyncpa [#allocation7], 0
    %16 = vsyncpa [#allocation5], 0
    // Predicated region
    $region2: #{tpu_custom_call.1} parent=1 // pred_check
      _
    $region3: #{tpu_custom_call.1} parent=1 // pred_check_branch
      %18 = sbr.rel (0) target = $region5
    $region4: #{tpu_custom_call.1} parent=1 // pred_region
      %20 = vsyncadd [#allocation4], 0
      %s22 = sshll.u32 %s0, 4
      %s23 = int_to_ptr.hbm [resolvable:$true] %s22
      %s24 = sshll.u32 [#allocation3], 4
      %s25 = int_to_ptr.vmem [resolvable:$true] %s24
      %27 = dma.hbm_to_vmem [thread:$0]  %s23, 128, %s25, [#allocation4]
    $region5: #{tpu_custom_call.1} parent=1 // pred_fallthru
      _
    // Predicated region
    $region6: #{tpu_custom_call.1} parent=1 // pred_check
      _
    $region7: #{tpu_custom_call.1} parent=1 // pred_check_branch
      %29 = sbr.rel (0) target = $region9
    $region8: #{tpu_custom_call.1} parent=1 // pred_region
      %31 = vsyncadd [#allocation7], 0
      %s32 = sshll.u32 %s1, 4
      %s33 = int_to_ptr.hbm [resolvable:$true] %s32
      %s34 = sshll.u32 [#allocation6], 4
      %s35 = int_to_ptr.vmem [resolvable:$true] %s34
      %40 = dma.hbm_to_vmem [thread:$0]  %s33, 256, %s35, [#allocation7], 64, 64, 4
    $region9: #{tpu_custom_call.1} parent=1 // pred_fallthru
      _
    // Predicated region
    $region10: #{tpu_custom_call.1} parent=1 // pred_check
      _
    $region11: #{tpu_custom_call.1} parent=1 // pred_check_branch
      %42 = sbr.rel (0) target = $region13
    $region12: #{tpu_custom_call.1} parent=1 // pred_region
      _
    $region13: #{tpu_custom_call.1} parent=1 // pred_fallthru
      _
    // Predicated region
    $region14: #{tpu_custom_call.1} parent=1 // pred_check
      _
    $region15: #{tpu_custom_call.1} parent=1 // pred_check_branch
      %44 = sbr.rel (0) target = $region17
    $region16: #{tpu_custom_call.1} parent=1 // pred_region
      %46 = vsyncadd [#allocation7], 0
      %s47 = sshll.u32 %s3, 4
      %s48 = int_to_ptr.hbm [resolvable:$true] %s47
      %s49 = sshll.u32 [#allocation8], 4
      %s50 = int_to_ptr.vmem [resolvable:$true] %s49
      %55 = dma.hbm_to_vmem [thread:$0]  %s48, 1024, %s50, [#allocation7], 64, 64, 4
    $region17: #{tpu_custom_call.1} parent=1 // pred_fallthru
      _
    // Predicated region
    $region18: #{tpu_custom_call.1} parent=1 // pred_check
      _
    $region19: #{tpu_custom_call.1} parent=1 // pred_check_branch
      %57 = sbr.rel (0) target = $region21
    $region20: #{tpu_custom_call.1} parent=1 // pred_region
      _
    $region21: #{tpu_custom_call.1} parent=1 // pred_fallthru
      _
    // Predicated region
    $region22: #{tpu_custom_call.1} parent=1 // pred_check
      _
    $region23: #{tpu_custom_call.1} parent=1 // pred_check_branch
      %59 = sbr.rel (0) target = $region25
    $region24: #{tpu_custom_call.1} parent=1 // pred_region
      _
    $region25: #{tpu_custom_call.1} parent=1 // pred_fallthru
      _
    // Predicated region
    $region26: #{tpu_custom_call.1} parent=1 // pred_check
      _
    $region27: #{tpu_custom_call.1} parent=1 // pred_check_branch
      %61 = sbr.rel (0) target = $region29
    $region28: #{tpu_custom_call.1} parent=1 // pred_region
      _
    $region29: #{tpu_custom_call.1} parent=1 // pred_fallthru
      _
    // Predicated region
    $region30: #{tpu_custom_call.1} parent=1 // pred_check
      _
    $region31: #{tpu_custom_call.1} parent=1 // pred_check_branch
      %63 = sbr.rel (0) target = $region33
    $region32: #{tpu_custom_call.1} parent=1 // pred_region
      %65 = dma.done [#allocation4], 128
    $region33: #{tpu_custom_call.1} parent=1 // pred_fallthru
      _
    // Predicated region
    $region34: #{tpu_custom_call.1} parent=1 // pred_check
      _
    $region35: #{tpu_custom_call.1} parent=1 // pred_check_branch
      %67 = sbr.rel (0) target = $region37
    $region36: #{tpu_custom_call.1} parent=1 // pred_region
      %69 = dma.done [#allocation7], 256
    $region37: #{tpu_custom_call.1} parent=1 // pred_fallthru
      _
    // Predicated region
    $region38: #{tpu_custom_call.1} parent=1 // pred_check
      _
    $region39: #{tpu_custom_call.1} parent=1 // pred_check_branch
      %71 = sbr.rel (0) target = $region41
    $region40: #{tpu_custom_call.1} parent=1 // pred_region
      %73 = dma.done [#allocation7], 1024
    $region41: #{tpu_custom_call.1} parent=1 // pred_fallthru
      _
    %v75 = vld [vmem:[#allocation3] sm:$0xff]
    %v76 = vpack.c.bf16 %v75, %v75
    %v77 = vld [vmem:[#allocation6] sm:$0xf]
    %v78 = vld [vmem:[#allocation6 + $0x4] sm:$0xf]
    %v79 = vld [vmem:[#allocation6 + $0x8] sm:$0xf]
    %v80 = vld [vmem:[#allocation6 + $0xc] sm:$0xf]
    %v81 = vld [vmem:[%s2] sm:$0x1]
    %v83 = vperm.slane %v81, 0
    %v89 = vunpack.c.l.b16 %v77
    %v90 = vunpack.c.l.b16 %v78
    %v91 = vunpack.c.l.b16 %v79
    %v92 = vunpack.c.l.b16 %v80
    %v93 = vpack.c.b16 %v90, %v89
    %v94 = vpack.c.b16 %v92, %v91
    %vm97 = vcmask 261120
    %v99 = vsel %vm97, %v76, 0
    %101 = vmatpush.bf16.msra.mxu0 0
    %102 = vmatpush.bf16.msra.mxu0 0
    %103 = vmatpush.bf16.msra.mxu0 0
    %104 = vmatpush.bf16.msra.mxu0 0
    %105 = vmatpush.bf16.msra.mxu0 0
    %106 = vmatpush.bf16.msra.mxu0 0
    %107 = vmatpush.bf16.msra.mxu0 %v94
    %108 = vmatpush.bf16.msra.mxu0 %v93
    %109 = vmatmul.bf16.gmra.mxu0 %v99
    %v110 = vpop.f32.mrf.mxu0
    %v111 = vadd.f32 %v83, %v110
    %v112 = vpop.f32.mrf.mxu0
    %113 = vdwg.mxu0
    %v114 = vmax.f32 %v111, 0.0
    %v115 = vpack.c.bf16 %v114, %v114
    %v116 = vld [vmem:[#allocation8] sm:$0xf]
    %v117 = vld [vmem:[#allocation8 + $0x4] sm:$0xf]
    %v118 = vld [vmem:[#allocation8 + $0x8] sm:$0xf]
    %v119 = vld [vmem:[#allocation8 + $0xc] sm:$0xf]
    %v120 = vld [vmem:[#allocation8 + $0x10] sm:$0xf]
    %v121 = vld [vmem:[#allocation8 + $0x14] sm:$0xf]
    %v122 = vld [vmem:[#allocation8 + $0x18] sm:$0xf]
    %v123 = vld [vmem:[#allocation8 + $0x1c] sm:$0xf]
    %v124 = vld [vmem:[#allocation8 + $0x20] sm:$0xf]
    %v125 = vld [vmem:[#allocation8 + $0x24] sm:$0xf]
    %v126 = vld [vmem:[#allocation8 + $0x28] sm:$0xf]
    %v127 = vld [vmem:[#allocation8 + $0x2c] sm:$0xf]
    %v128 = vld [vmem:[#allocation8 + $0x30] sm:$0xf]
    %v129 = vld [vmem:[#allocation8 + $0x34] sm:$0xf]
    %v130 = vld [vmem:[#allocation8 + $0x38] sm:$0xf]
    %v131 = vld [vmem:[#allocation8 + $0x3c] sm:$0xf]
    %v132 = vld [vmem:[%s4] sm:$0x1]
    %v134 = vperm.slane %v132, 0
    %v152 = vunpack.c.l.b16 %v116
    %v153 = vunpack.c.l.b16 %v117
    %v154 = vunpack.c.l.b16 %v118
    %v155 = vunpack.c.l.b16 %v119
    %v156 = vunpack.c.l.b16 %v120
    %v157 = vunpack.c.l.b16 %v121
    %v158 = vunpack.c.l.b16 %v122
    %v159 = vunpack.c.l.b16 %v123
    %v160 = vunpack.c.l.b16 %v124
    %v161 = vunpack.c.l.b16 %v125
    %v162 = vunpack.c.l.b16 %v126
    %v163 = vunpack.c.l.b16 %v127
    %v164 = vunpack.c.l.b16 %v128
    %v165 = vunpack.c.l.b16 %v129
    %v166 = vunpack.c.l.b16 %v130
    %v167 = vunpack.c.l.b16 %v131
    %v168 = vpack.c.b16 %v153, %v152
    %v169 = vpack.c.b16 %v155, %v154
    %v170 = vpack.c.b16 %v157, %v156
    %v171 = vpack.c.b16 %v159, %v158
    %v172 = vpack.c.b16 %v161, %v160
    %v173 = vpack.c.b16 %v163, %v162
    %v174 = vpack.c.b16 %v165, %v164
    %v175 = vpack.c.b16 %v167, %v166
    %184 = vmatpush.bf16.msra.mxu0 %v175
    %185 = vmatpush.bf16.msra.mxu0 %v174
    %186 = vmatpush.bf16.msra.mxu0 %v173
    %187 = vmatpush.bf16.msra.mxu0 %v172
    %188 = vmatpush.bf16.msra.mxu0 %v171
    %189 = vmatpush.bf16.msra.mxu0 %v170
    %190 = vmatpush.bf16.msra.mxu0 %v169
    %191 = vmatpush.bf16.msra.mxu0 %v168
    %192 = vmatmul.bf16.gmra.mxu0 %v115
    %v193 = vpop.f32.mrf.mxu0
    %v194 = vadd.f32 %v134, %v193
    %v195 = vpop.f32.mrf.mxu0
    %196 = vdwg.mxu0
    %v197 = vmax.f32 %v194, 0.0
    %v198 = vld [vmem:[%s5] sm:$0x1]
    %v199 = vpack.c.bf16 %v197, %v197
    %v200 = vld [vmem:[#allocation2] sm:$0x1]
    %202 = vset.pattern.permute.xlu0 0
    %203 = vperm.xlu0 %202, %v200
    %v204 = vpop.permute.xlu0 %203
    %v206 = vperm.slane %v204, 0
    %207 = vmatpush.bf16.xpose.msra.mxu0 0
    %208 = vmatpush.bf16.xpose.msra.mxu0 0
    %209 = vmatpush.bf16.xpose.msra.mxu0 0
    %210 = vmatpush.bf16.xpose.msra.mxu0 0
    %211 = vmatpush.bf16.xpose.msra.mxu0 0
    %212 = vmatpush.bf16.xpose.msra.mxu0 0
    %213 = vmatpush.bf16.xpose.msra.mxu0 0
    %214 = vmatpush.bf16.xpose.msra.mxu0 %v199
    %215 = vmatmul.bf16.gmra.mxu0 %v198
    %v216 = vpop.f32.mrf.mxu0
    %v217 = vadd.f32 %v206, %v216
    %v218 = vpop.f32.mrf.mxu0
    %219 = vdwg.mxu0
    %vm220 = vcmask 57344
    %221 = vst.msk [vmem:[#allocation9] sm:$0x1] %vm220, %v217
    // Predicated region
    $region42: #{tpu_custom_call.1} parent=1 // pred_check
      _
    $region43: #{tpu_custom_call.1} parent=1 // pred_check_branch
      %223 = sbr.rel (0) target = $region45
    $region44: #{tpu_custom_call.1} parent=1 // pred_region
      %225 = vsyncadd [#allocation5], 0
      %s227 = sshll.u32 [#allocation9], 4
      %s228 = int_to_ptr.vmem [resolvable:$true] %s227
      %s229 = sshll.u32 %s7, 4
      %s230 = int_to_ptr.hbm [resolvable:$true] %s229
      %232 = dma.vmem_to_hbm [thread:$0]  %s228, 16, %s230, [#allocation5]
    $region45: #{tpu_custom_call.1} parent=1 // pred_fallthru
      _
    // Predicated region
    $region46: #{tpu_custom_call.1} parent=1 // pred_check
      _
    $region47: #{tpu_custom_call.1} parent=1 // pred_check_branch
      %234 = sbr.rel (0) target = $region49
    $region48: #{tpu_custom_call.1} parent=1 // pred_region
      %236 = dma.done [#allocation5], 16
    $region49: #{tpu_custom_call.1} parent=1 // pred_fallthru
      _
    %237 = vsyncpa [#allocation4], 1
    %238 = vsyncpa [#allocation7], 1
    %239 = vsyncpa [#allocation5], 1

</llo_original>
